<compile_context>
chip_gen: v7x
topology: tpu7x:2x2x1
jax: 0.10.0
libtpu: 0.0.40
codegen_flags: <defaults>
</compile_context>

<pallas_src>
import jax
import jax.numpy as jnp
from jax.experimental import pallas as pl
from jax.experimental.pallas import tpu as pltpu


def _round_up(x, m):
    return (x + m - 1) // m * m


# --------------------------------------------------------------------------
# Fused kernel: per time chunk,  h_t = tanh(x_t @ W_xh + h_{t-1} @ W_hh + b_h)
# --------------------------------------------------------------------------
def _make_rnn_kernel(tc, unroll):
    def kernel(x_ref, wxh_ref, whh_ref, b_ref, h0_ref, out_ref, h_ref):
        bt, Hp = h_ref.shape

        # (Re)load the caller-provided initial state at the first chunk of
        # each batch tile; h_ref carries the state across time chunks.
        @pl.when(pl.program_id(1) == 0)
        def _():
            h_ref[...] = h0_ref[...]

        # Hoist loop-invariant loads / broadcasts out of the serial loop
        # (JAX does not CSE broadcast_in_dim inside the loop).
        w_xh = wxh_ref[...]                               # (D,  Hp) bf16
        w_hh = whh_ref[...]                               # (Hp, Hp) bf16
        bias = jnp.broadcast_to(b_ref[...], (bt, Hp))     # (bt, Hp) f32

        def step(t, h):
            # x_t @ W_xh does not depend on h: with unroll the scheduler
            # issues these MXU pushes inside the latency bubbles of the
            # serial h @ W_hh -> add -> tanh chain (fused input projection,
            # no HBM round trip for an XP intermediate).
            xp_t = jnp.dot(x_ref[t], w_xh,
                           preferred_element_type=jnp.float32)
            hh_t = jnp.dot(h.astype(jnp.bfloat16), w_hh,
                           preferred_element_type=jnp.float32)
            h_new = jnp.tanh(xp_t + hh_t + bias)          # fp32 VPU add + EUP tanh
            out_ref[t] = h_new.astype(out_ref.dtype)
            return h_new

        # Hidden state carried in registers across the chunk; write the VMEM
        # carry once at chunk end (cross-chunk carry only).
        h_final = jax.lax.fori_loop(0, tc, step, h_ref[...], unroll=unroll)
        h_ref[...] = h_final

    return kernel


# --------------------------------------------------------------------------
# Wrapper: Pallas equivalent of RNNScratch.forward
# --------------------------------------------------------------------------
def rnn_scratch_forward(inputs, W_xh, W_hh, b_h, state=None,
                        time_chunk=64, batch_tile=None,
                        out_dtype=jnp.bfloat16):
    """inputs: (T, B, D).  Returns (outputs (T, B, H), final_state (B, H)).

    The per-step matmul is (B, H) x (H, H); with a tiny batch it uses only a
    sliver of the MXU and the step time is fixed latency — if multiple
    independent sequences are available, batch them into B (rows up to ~128
    on v5e / ~256 on v6e/v7x ride essentially free in the same serial chain).
    On v7x with B >= 32, pass batch_tile=ceil(B/2) to shard the recurrence
    across both TensorCores (leave default on v5e/v6e).
    """
    T, B, D = inputs.shape
    H = W_xh.shape[1]

    if state is None:
        h0 = jnp.zeros((B, H), dtype=jnp.float32)
    else:
        (h0,) = state
        h0 = h0.astype(jnp.float32)

    # Lane/sublane-friendly padded sizes.  D is deliberately NOT padded.
    Hp = _round_up(H, 128)
    Bp = _round_up(B, 8)
    if batch_tile is None or batch_tile >= Bp:
        bt = Bp
    else:
        bt = max(16, _round_up(batch_tile, 16))   # 16 = bf16 sublane packing
        Bp = _round_up(Bp, bt)
    n_btiles = Bp // bt

    tc = min(time_chunk, T)
    Tp = _round_up(T, tc)
    n_chunks = Tp // tc
    # TODO(synk): padded tail timesteps in the last chunk compute throwaway
    # steps (correct, just wasted work) — mask with a dynamic trip count if
    # T % time_chunk is routinely large.
    unroll = 8 if tc % 8 == 0 else (4 if tc % 4 == 0 else (2 if tc % 2 == 0 else 1))

    # Cast BEFORE padding (halves the padded copy and the kernel read).
    x_bf = inputs.astype(jnp.bfloat16)
    x_p = jnp.pad(x_bf, ((0, Tp - T), (0, Bp - B), (0, 0)))

    # Weight pad/cast is tiny and constant-folded/hoisted when the caller
    # jits the surrounding step function.
    wxh_p = jnp.pad(W_xh.astype(jnp.bfloat16), ((0, 0), (0, Hp - H)))
    whh_p = jnp.pad(W_hh.astype(jnp.bfloat16), ((0, Hp - H), (0, Hp - H)))
    bh_p = jnp.pad(b_h.astype(jnp.float32), (0, Hp - H)).reshape(1, Hp)
    h0_p = jnp.pad(h0, ((0, Bp - B), (0, Hp - H)))

    # Explicit VMEM budget (double-buffered inputs/outputs + scratch) so the
    # default 16/32 MiB scoped limits don't cause spurious failures as H grows.
    ob = jnp.dtype(out_dtype).itemsize
    vmem_est = (2 * tc * bt * D * 2            # x chunk (bf16)
                + 2 * tc * bt * Hp * ob        # out chunk
                + 2 * max(D, 8) * Hp * 2       # W_xh
                + 2 * Hp * Hp * 2              # W_hh
                + 2 * 8 * Hp * 4               # b_h row
                + 2 * bt * Hp * 4              # h0
                + bt * Hp * 4)                 # carried-h scratch
    vmem_limit = min(max(int(vmem_est * 1.5) + (1 << 20), 32 * 1024 * 1024),
                     128 * 1024 * 1024)

    outs_p = pl.pallas_call(
        _make_rnn_kernel(tc, unroll),
        out_shape=jax.ShapeDtypeStruct((Tp, Bp, Hp), out_dtype),
        grid_spec=pltpu.PrefetchScalarGridSpec(
            num_scalar_prefetch=0,
            grid=(n_btiles, n_chunks),
            in_specs=[
                pl.BlockSpec((tc, bt, D), lambda bi, c: (c, bi, 0)),  # X chunk
                pl.BlockSpec((D, Hp), lambda bi, c: (0, 0)),          # W_xh
                pl.BlockSpec((Hp, Hp), lambda bi, c: (0, 0)),         # W_hh
                pl.BlockSpec((1, Hp), lambda bi, c: (0, 0)),          # b_h
                pl.BlockSpec((bt, Hp), lambda bi, c: (bi, 0)),        # initial h
            ],
            out_specs=pl.BlockSpec((tc, bt, Hp), lambda bi, c: (c, bi, 0)),
            scratch_shapes=[pltpu.VMEM((bt, Hp), jnp.float32)],       # carried h
        ),
        compiler_params=pltpu.CompilerParams(
            dimension_semantics=("parallel", "arbitrary"),
            vmem_limit_bytes=vmem_limit,
        ),
    )(x_p, wxh_p, whh_p, bh_p, h0_p)

    outputs = outs_p[:T, :B, :H]
    final_state = outputs[-1]          # zero-cost slice; no extra HBM output
    return outputs, final_state


def _reference_forward(inputs, W_xh, W_hh, b_h, h0):
    def step(h, x):
        h_new = jnp.tanh(x @ W_xh + h @ W_hh + b_h)
        return h_new, h_new
    h_final, outs = jax.lax.scan(step, h0, inputs)
    return outs, h_final


if __name__ == "__main__":
    # Small shapes consistent with the module: (seq, batch, num_inputs).
    T, B, D, H = 8, 4, 8, 16
    sigma = 0.01

    key = jax.random.PRNGKey(0)
    k_x, k_wxh, k_whh = jax.random.split(key, 3)

    inputs = jax.random.normal(k_x, (T, B, D), dtype=jnp.float32)
    W_xh = jax.random.normal(k_wxh, (D, H), dtype=jnp.float32) * sigma
    W_hh = jax.random.normal(k_whh, (H, H), dtype=jnp.float32) * sigma
    b_h = jnp.zeros((H,), dtype=jnp.float32)

    outputs, final_state = rnn_scratch_forward(inputs, W_xh, W_hh, b_h)
    outputs = jax.block_until_ready(outputs)
    final_state = jax.block_until_ready(final_state)

    # Sanity check against a pure-fp32 JAX reference.  The kernel uses bf16
    # MXU operands with fp32 accumulation/carry and emits bf16 outputs, so
    # allow a small tolerance.
    h0 = jnp.zeros((B, H), dtype=jnp.float32)
    ref_out, ref_final = _reference_forward(inputs, W_xh, W_hh, b_h, h0)
    assert outputs.shape == (T, B, H) and final_state.shape == (B, H)
    assert jnp.allclose(outputs.astype(jnp.float32), ref_out,
                        atol=2e-3, rtol=2e-2)
    assert jnp.allclose(final_state.astype(jnp.float32), ref_final,
                        atol=2e-3, rtol=2e-2)

    print("KERNEL_OK")
</pallas_src>

<mosaic_0001>
module attributes {stable_mosaic.version = 11 : i64} {
  func.func @kernel(%arg0: i32, %arg1: i32, %arg2: memref<8x8x8xbf16, #tpu.memory_space<vmem>>, %arg3: memref<8x128xbf16, #tpu.memory_space<vmem>>, %arg4: memref<128x128xbf16, #tpu.memory_space<vmem>>, %arg5: memref<1x128xf32, #tpu.memory_space<vmem>>, %arg6: memref<8x128xf32, #tpu.memory_space<vmem>>, %arg7: memref<8x8x128xbf16, #tpu.memory_space<vmem>>, %arg8: memref<8x128xf32, #tpu.memory_space<vmem>>) attributes {dimension_semantics = [#tpu.dimension_semantics<parallel>, #tpu.dimension_semantics<arbitrary>], iteration_bounds = array<i64: 1, 1>, scalar_prefetch = 0 : i64, scratch_operands = 1 : i64, tpu.core_type = #tpu.core_type<tc>, window_params = [{transform_indices = @transform_0, window_bounds = array<i64: 8, 8, 8>}, {pipeline_mode = #tpu.pipeline_mode<synchronous>, transform_indices = @transform_1, window_bounds = array<i64: 8, 128>}, {pipeline_mode = #tpu.pipeline_mode<synchronous>, transform_indices = @transform_2, window_bounds = array<i64: 128, 128>}, {pipeline_mode = #tpu.pipeline_mode<synchronous>, transform_indices = @transform_3, window_bounds = array<i64: 1, 128>}, {transform_indices = @transform_4, window_bounds = array<i64: 8, 128>}, {transform_indices = @transform_5, window_bounds = array<i64: 8, 8, 128>}]} {
    %c0_i32 = arith.constant 0 : i32
    %0 = arith.cmpi eq, %arg1, %c0_i32 : i32
    %1 = arith.extui %0 : i1 to i32
    %c0_i32_0 = arith.constant 0 : i32
    %2 = arith.cmpi ne, %1, %c0_i32_0 : i32
    scf.if %2 {
      %c0_58 = arith.constant 0 : index
      %c0_59 = arith.constant 0 : index
      %122 = vector.load %arg6[%c0_58, %c0_59] : memref<8x128xf32, #tpu.memory_space<vmem>>, vector<8x128xf32>
      %c0_60 = arith.constant 0 : index
      %c0_61 = arith.constant 0 : index
      %123 = vector.load %arg8[%c0_60, %c0_61] : memref<8x128xf32, #tpu.memory_space<vmem>>, vector<8x128xf32>
      tpu.vector_store %arg8[%c0_60, %c0_61], %122 {strides = array<i32>} : memref<8x128xf32, #tpu.memory_space<vmem>>, vector<8x128xf32>,
    } else {
    }
    %c0 = arith.constant 0 : index
    %c0_1 = arith.constant 0 : index
    %3 = vector.load %arg3[%c0, %c0_1] : memref<8x128xbf16, #tpu.memory_space<vmem>>, vector<8x128xbf16>
    %c0_2 = arith.constant 0 : index
    %c0_3 = arith.constant 0 : index
    %4 = vector.load %arg4[%c0_2, %c0_3] : memref<128x128xbf16, #tpu.memory_space<vmem>>, vector<128x128xbf16>
    %c0_4 = arith.constant 0 : index
    %c0_5 = arith.constant 0 : index
    %5 = vector.load %arg5[%c0_4, %c0_5] : memref<1x128xf32, #tpu.memory_space<vmem>>, vector<1x128xf32>
    %6 = vector.shape_cast %5 : vector<1x128xf32> to vector<1x128xf32>
    %7 = vector.broadcast %6 : vector<1x128xf32> to vector<8x128xf32>
    %c0_6 = arith.constant 0 : index
    %c0_7 = arith.constant 0 : index
    %8 = vector.load %arg8[%c0_6, %c0_7] : memref<8x128xf32, #tpu.memory_space<vmem>>, vector<8x128xf32>
    %c0_i32_8 = arith.constant 0 : i32
    %9 = arith.index_cast %c0_i32_8 : i32 to index
    %c0_9 = arith.constant 0 : index
    %c0_10 = arith.constant 0 : index
    %10 = vector.load %arg2[%9, %c0_9, %c0_10] : memref<8x8x8xbf16, #tpu.memory_space<vmem>>, vector<1x8x8xbf16>
    %11 = vector.shape_cast %10 : vector<1x8x8xbf16> to vector<8x8xbf16>
    %cst = arith.constant dense<0.000000e+00> : vector<8x128xf32>
    %12 = tpu.matmul %11, %3, %cst {dimension_numbers = #tpu.dot_dimension_numbers<[1], [0], [0], [1], [0, 0, 1, 1], [], []>} : vector<8x8xbf16>, vector<8x128xbf16>, vector<8x128xf32> -> vector<8x128xf32>
    %13 = arith.truncf %8 : vector<8x128xf32> to vector<8x128xbf16>
    %cst_11 = arith.constant dense<0.000000e+00> : vector<8x128xf32>
    %14 = tpu.matmul %13, %4, %cst_11 {dimension_numbers = #tpu.dot_dimension_numbers<[1], [0], [0], [1], [0, 0, 1, 1], [], []>} : vector<8x128xbf16>, vector<128x128xbf16>, vector<8x128xf32> -> vector<8x128xf32>
    %15 = arith.addf %12, %14 : vector<8x128xf32>
    %16 = arith.addf %15, %7 : vector<8x128xf32>
    %17 = math.tanh %16 : vector<8x128xf32>
    %18 = arith.truncf %17 : vector<8x128xf32> to vector<8x128xbf16>
    %19 = arith.index_cast %c0_i32_8 : i32 to index
    %c0_12 = arith.constant 0 : index
    %c0_13 = arith.constant 0 : index
    %20 = vector.load %arg7[%19, %c0_12, %c0_13] : memref<8x8x128xbf16, #tpu.memory_space<vmem>>, vector<1x8x128xbf16>
    %21 = vector.shape_cast %20 : vector<1x8x128xbf16> to vector<8x128xbf16>
    %22 = vector.shape_cast %18 : vector<8x128xbf16> to vector<1x8x128xbf16>
    tpu.vector_store %arg7[%19, %c0_12, %c0_13], %22 {strides = array<i32>} : memref<8x8x128xbf16, #tpu.memory_space<vmem>>, vector<1x8x128xbf16>,
    %c1_i32 = arith.constant 1 : i32
    %23 = arith.index_cast %c1_i32 : i32 to index
    %c0_14 = arith.constant 0 : index
    %c0_15 = arith.constant 0 : index
    %24 = vector.load %arg2[%23, %c0_14, %c0_15] : memref<8x8x8xbf16, #tpu.memory_space<vmem>>, vector<1x8x8xbf16>
    %25 = vector.shape_cast %24 : vector<1x8x8xbf16> to vector<8x8xbf16>
    %cst_16 = arith.constant dense<0.000000e+00> : vector<8x128xf32>
    %26 = tpu.matmul %25, %3, %cst_16 {dimension_numbers = #tpu.dot_dimension_numbers<[1], [0], [0], [1], [0, 0, 1, 1], [], []>} : vector<8x8xbf16>, vector<8x128xbf16>, vector<8x128xf32> -> vector<8x128xf32>
    %27 = arith.truncf %17 : vector<8x128xf32> to vector<8x128xbf16>
    %cst_17 = arith.constant dense<0.000000e+00> : vector<8x128xf32>
    %28 = tpu.matmul %27, %4, %cst_17 {dimension_numbers = #tpu.dot_dimension_numbers<[1], [0], [0], [1], [0, 0, 1, 1], [], []>} : vector<8x128xbf16>, vector<128x128xbf16>, vector<8x128xf32> -> vector<8x128xf32>
    %29 = arith.addf %26, %28 : vector<8x128xf32>
    %30 = arith.addf %29, %7 : vector<8x128xf32>
    %31 = math.tanh %30 : vector<8x128xf32>
    %32 = arith.truncf %31 : vector<8x128xf32> to vector<8x128xbf16>
    %33 = arith.index_cast %c1_i32 : i32 to index
    %c0_18 = arith.constant 0 : index
    %c0_19 = arith.constant 0 : index
    %34 = vector.load %arg7[%33, %c0_18, %c0_19] : memref<8x8x128xbf16, #tpu.memory_space<vmem>>, vector<1x8x128xbf16>
    %35 = vector.shape_cast %34 : vector<1x8x128xbf16> to vector<8x128xbf16>
    %36 = vector.shape_cast %32 : vector<8x128xbf16> to vector<1x8x128xbf16>
    tpu.vector_store %arg7[%33, %c0_18, %c0_19], %36 {strides = array<i32>} : memref<8x8x128xbf16, #tpu.memory_space<vmem>>, vector<1x8x128xbf16>,
    %c2_i32 = arith.constant 2 : i32
    %37 = arith.index_cast %c2_i32 : i32 to index
    %c0_20 = arith.constant 0 : index
    %c0_21 = arith.constant 0 : index
    %38 = vector.load %arg2[%37, %c0_20, %c0_21] : memref<8x8x8xbf16, #tpu.memory_space<vmem>>, vector<1x8x8xbf16>
    %39 = vector.shape_cast %38 : vector<1x8x8xbf16> to vector<8x8xbf16>
    %cst_22 = arith.constant dense<0.000000e+00> : vector<8x128xf32>
    %40 = tpu.matmul %39, %3, %cst_22 {dimension_numbers = #tpu.dot_dimension_numbers<[1], [0], [0], [1], [0, 0, 1, 1], [], []>} : vector<8x8xbf16>, vector<8x128xbf16>, vector<8x128xf32> -> vector<8x128xf32>
    %41 = arith.truncf %31 : vector<8x128xf32> to vector<8x128xbf16>
    %cst_23 = arith.constant dense<0.000000e+00> : vector<8x128xf32>
    %42 = tpu.matmul %41, %4, %cst_23 {dimension_numbers = #tpu.dot_dimension_numbers<[1], [0], [0], [1], [0, 0, 1, 1], [], []>} : vector<8x128xbf16>, vector<128x128xbf16>, vector<8x128xf32> -> vector<8x128xf32>
    %43 = arith.addf %40, %42 : vector<8x128xf32>
    %44 = arith.addf %43, %7 : vector<8x128xf32>
    %45 = math.tanh %44 : vector<8x128xf32>
    %46 = arith.truncf %45 : vector<8x128xf32> to vector<8x128xbf16>
    %47 = arith.index_cast %c2_i32 : i32 to index
    %c0_24 = arith.constant 0 : index
    %c0_25 = arith.constant 0 : index
    %48 = vector.load %arg7[%47, %c0_24, %c0_25] : memref<8x8x128xbf16, #tpu.memory_space<vmem>>, vector<1x8x128xbf16>
    %49 = vector.shape_cast %48 : vector<1x8x128xbf16> to vector<8x128xbf16>
    %50 = vector.shape_cast %46 : vector<8x128xbf16> to vector<1x8x128xbf16>
    tpu.vector_store %arg7[%47, %c0_24, %c0_25], %50 {strides = array<i32>} : memref<8x8x128xbf16, #tpu.memory_space<vmem>>, vector<1x8x128xbf16>,
    %c3_i32 = arith.constant 3 : i32
    %51 = arith.index_cast %c3_i32 : i32 to index
    %c0_26 = arith.constant 0 : index
    %c0_27 = arith.constant 0 : index
    %52 = vector.load %arg2[%51, %c0_26, %c0_27] : memref<8x8x8xbf16, #tpu.memory_space<vmem>>, vector<1x8x8xbf16>
    %53 = vector.shape_cast %52 : vector<1x8x8xbf16> to vector<8x8xbf16>
    %cst_28 = arith.constant dense<0.000000e+00> : vector<8x128xf32>
    %54 = tpu.matmul %53, %3, %cst_28 {dimension_numbers = #tpu.dot_dimension_numbers<[1], [0], [0], [1], [0, 0, 1, 1], [], []>} : vector<8x8xbf16>, vector<8x128xbf16>, vector<8x128xf32> -> vector<8x128xf32>
    %55 = arith.truncf %45 : vector<8x128xf32> to vector<8x128xbf16>
    %cst_29 = arith.constant dense<0.000000e+00> : vector<8x128xf32>
    %56 = tpu.matmul %55, %4, %cst_29 {dimension_numbers = #tpu.dot_dimension_numbers<[1], [0], [0], [1], [0, 0, 1, 1], [], []>} : vector<8x128xbf16>, vector<128x128xbf16>, vector<8x128xf32> -> vector<8x128xf32>
    %57 = arith.addf %54, %56 : vector<8x128xf32>
    %58 = arith.addf %57, %7 : vector<8x128xf32>
    %59 = math.tanh %58 : vector<8x128xf32>
    %60 = arith.truncf %59 : vector<8x128xf32> to vector<8x128xbf16>
    %61 = arith.index_cast %c3_i32 : i32 to index
    %c0_30 = arith.constant 0 : index
    %c0_31 = arith.constant 0 : index
    %62 = vector.load %arg7[%61, %c0_30, %c0_31] : memref<8x8x128xbf16, #tpu.memory_space<vmem>>, vector<1x8x128xbf16>
    %63 = vector.shape_cast %62 : vector<1x8x128xbf16> to vector<8x128xbf16>
    %64 = vector.shape_cast %60 : vector<8x128xbf16> to vector<1x8x128xbf16>
    tpu.vector_store %arg7[%61, %c0_30, %c0_31], %64 {strides = array<i32>} : memref<8x8x128xbf16, #tpu.memory_space<vmem>>, vector<1x8x128xbf16>,
    %c4_i32 = arith.constant 4 : i32
    %65 = arith.index_cast %c4_i32 : i32 to index
    %c0_32 = arith.constant 0 : index
    %c0_33 = arith.constant 0 : index
    %66 = vector.load %arg2[%65, %c0_32, %c0_33] : memref<8x8x8xbf16, #tpu.memory_space<vmem>>, vector<1x8x8xbf16>
    %67 = vector.shape_cast %66 : vector<1x8x8xbf16> to vector<8x8xbf16>
    %cst_34 = arith.constant dense<0.000000e+00> : vector<8x128xf32>
    %68 = tpu.matmul %67, %3, %cst_34 {dimension_numbers = #tpu.dot_dimension_numbers<[1], [0], [0], [1], [0, 0, 1, 1], [], []>} : vector<8x8xbf16>, vector<8x128xbf16>, vector<8x128xf32> -> vector<8x128xf32>
    %69 = arith.truncf %59 : vector<8x128xf32> to vector<8x128xbf16>
    %cst_35 = arith.constant dense<0.000000e+00> : vector<8x128xf32>
    %70 = tpu.matmul %69, %4, %cst_35 {dimension_numbers = #tpu.dot_dimension_numbers<[1], [0], [0], [1], [0, 0, 1, 1], [], []>} : vector<8x128xbf16>, vector<128x128xbf16>, vector<8x128xf32> -> vector<8x128xf32>
    %71 = arith.addf %68, %70 : vector<8x128xf32>
    %72 = arith.addf %71, %7 : vector<8x128xf32>
    %73 = math.tanh %72 : vector<8x128xf32>
    %74 = arith.truncf %73 : vector<8x128xf32> to vector<8x128xbf16>
    %75 = arith.index_cast %c4_i32 : i32 to index
    %c0_36 = arith.constant 0 : index
    %c0_37 = arith.constant 0 : index
    %76 = vector.load %arg7[%75, %c0_36, %c0_37] : memref<8x8x128xbf16, #tpu.memory_space<vmem>>, vector<1x8x128xbf16>
    %77 = vector.shape_cast %76 : vector<1x8x128xbf16> to vector<8x128xbf16>
    %78 = vector.shape_cast %74 : vector<8x128xbf16> to vector<1x8x128xbf16>
    tpu.vector_store %arg7[%75, %c0_36, %c0_37], %78 {strides = array<i32>} : memref<8x8x128xbf16, #tpu.memory_space<vmem>>, vector<1x8x128xbf16>,
    %c5_i32 = arith.constant 5 : i32
    %79 = arith.index_cast %c5_i32 : i32 to index
    %c0_38 = arith.constant 0 : index
    %c0_39 = arith.constant 0 : index
    %80 = vector.load %arg2[%79, %c0_38, %c0_39] : memref<8x8x8xbf16, #tpu.memory_space<vmem>>, vector<1x8x8xbf16>
    %81 = vector.shape_cast %80 : vector<1x8x8xbf16> to vector<8x8xbf16>
    %cst_40 = arith.constant dense<0.000000e+00> : vector<8x128xf32>
    %82 = tpu.matmul %81, %3, %cst_40 {dimension_numbers = #tpu.dot_dimension_numbers<[1], [0], [0], [1], [0, 0, 1, 1], [], []>} : vector<8x8xbf16>, vector<8x128xbf16>, vector<8x128xf32> -> vector<8x128xf32>
    %83 = arith.truncf %73 : vector<8x128xf32> to vector<8x128xbf16>
    %cst_41 = arith.constant dense<0.000000e+00> : vector<8x128xf32>
    %84 = tpu.matmul %83, %4, %cst_41 {dimension_numbers = #tpu.dot_dimension_numbers<[1], [0], [0], [1], [0, 0, 1, 1], [], []>} : vector<8x128xbf16>, vector<128x128xbf16>, vector<8x128xf32> -> vector<8x128xf32>
    %85 = arith.addf %82, %84 : vector<8x128xf32>
    %86 = arith.addf %85, %7 : vector<8x128xf32>
    %87 = math.tanh %86 : vector<8x128xf32>
    %88 = arith.truncf %87 : vector<8x128xf32> to vector<8x128xbf16>
    %89 = arith.index_cast %c5_i32 : i32 to index
    %c0_42 = arith.constant 0 : index
    %c0_43 = arith.constant 0 : index
    %90 = vector.load %arg7[%89, %c0_42, %c0_43] : memref<8x8x128xbf16, #tpu.memory_space<vmem>>, vector<1x8x128xbf16>
    %91 = vector.shape_cast %90 : vector<1x8x128xbf16> to vector<8x128xbf16>
    %92 = vector.shape_cast %88 : vector<8x128xbf16> to vector<1x8x128xbf16>
    tpu.vector_store %arg7[%89, %c0_42, %c0_43], %92 {strides = array<i32>} : memref<8x8x128xbf16, #tpu.memory_space<vmem>>, vector<1x8x128xbf16>,
    %c6_i32 = arith.constant 6 : i32
    %93 = arith.index_cast %c6_i32 : i32 to index
    %c0_44 = arith.constant 0 : index
    %c0_45 = arith.constant 0 : index
    %94 = vector.load %arg2[%93, %c0_44, %c0_45] : memref<8x8x8xbf16, #tpu.memory_space<vmem>>, vector<1x8x8xbf16>
    %95 = vector.shape_cast %94 : vector<1x8x8xbf16> to vector<8x8xbf16>
    %cst_46 = arith.constant dense<0.000000e+00> : vector<8x128xf32>
    %96 = tpu.matmul %95, %3, %cst_46 {dimension_numbers = #tpu.dot_dimension_numbers<[1], [0], [0], [1], [0, 0, 1, 1], [], []>} : vector<8x8xbf16>, vector<8x128xbf16>, vector<8x128xf32> -> vector<8x128xf32>
    %97 = arith.truncf %87 : vector<8x128xf32> to vector<8x128xbf16>
    %cst_47 = arith.constant dense<0.000000e+00> : vector<8x128xf32>
    %98 = tpu.matmul %97, %4, %cst_47 {dimension_numbers = #tpu.dot_dimension_numbers<[1], [0], [0], [1], [0, 0, 1, 1], [], []>} : vector<8x128xbf16>, vector<128x128xbf16>, vector<8x128xf32> -> vector<8x128xf32>
    %99 = arith.addf %96, %98 : vector<8x128xf32>
    %100 = arith.addf %99, %7 : vector<8x128xf32>
    %101 = math.tanh %100 : vector<8x128xf32>
    %102 = arith.truncf %101 : vector<8x128xf32> to vector<8x128xbf16>
    %103 = arith.index_cast %c6_i32 : i32 to index
    %c0_48 = arith.constant 0 : index
    %c0_49 = arith.constant 0 : index
    %104 = vector.load %arg7[%103, %c0_48, %c0_49] : memref<8x8x128xbf16, #tpu.memory_space<vmem>>, vector<1x8x128xbf16>
    %105 = vector.shape_cast %104 : vector<1x8x128xbf16> to vector<8x128xbf16>
    %106 = vector.shape_cast %102 : vector<8x128xbf16> to vector<1x8x128xbf16>
    tpu.vector_store %arg7[%103, %c0_48, %c0_49], %106 {strides = array<i32>} : memref<8x8x128xbf16, #tpu.memory_space<vmem>>, vector<1x8x128xbf16>,
    %c7_i32 = arith.constant 7 : i32
    %107 = arith.index_cast %c7_i32 : i32 to index
    %c0_50 = arith.constant 0 : index
    %c0_51 = arith.constant 0 : index
    %108 = vector.load %arg2[%107, %c0_50, %c0_51] : memref<8x8x8xbf16, #tpu.memory_space<vmem>>, vector<1x8x8xbf16>
    %109 = vector.shape_cast %108 : vector<1x8x8xbf16> to vector<8x8xbf16>
    %cst_52 = arith.constant dense<0.000000e+00> : vector<8x128xf32>
    %110 = tpu.matmul %109, %3, %cst_52 {dimension_numbers = #tpu.dot_dimension_numbers<[1], [0], [0], [1], [0, 0, 1, 1], [], []>} : vector<8x8xbf16>, vector<8x128xbf16>, vector<8x128xf32> -> vector<8x128xf32>
    %111 = arith.truncf %101 : vector<8x128xf32> to vector<8x128xbf16>
    %cst_53 = arith.constant dense<0.000000e+00> : vector<8x128xf32>
    %112 = tpu.matmul %111, %4, %cst_53 {dimension_numbers = #tpu.dot_dimension_numbers<[1], [0], [0], [1], [0, 0, 1, 1], [], []>} : vector<8x128xbf16>, vector<128x128xbf16>, vector<8x128xf32> -> vector<8x128xf32>
    %113 = arith.addf %110, %112 : vector<8x128xf32>
    %114 = arith.addf %113, %7 : vector<8x128xf32>
    %115 = math.tanh %114 : vector<8x128xf32>
    %116 = arith.truncf %115 : vector<8x128xf32> to vector<8x128xbf16>
    %117 = arith.index_cast %c7_i32 : i32 to index
    %c0_54 = arith.constant 0 : index
    %c0_55 = arith.constant 0 : index
    %118 = vector.load %arg7[%117, %c0_54, %c0_55] : memref<8x8x128xbf16, #tpu.memory_space<vmem>>, vector<1x8x128xbf16>
    %119 = vector.shape_cast %118 : vector<1x8x128xbf16> to vector<8x128xbf16>
    %120 = vector.shape_cast %116 : vector<8x128xbf16> to vector<1x8x128xbf16>
    tpu.vector_store %arg7[%117, %c0_54, %c0_55], %120 {strides = array<i32>} : memref<8x8x128xbf16, #tpu.memory_space<vmem>>, vector<1x8x128xbf16>,
    %c8_i32 = arith.constant 8 : i32
    %c0_56 = arith.constant 0 : index
    %c0_57 = arith.constant 0 : index
    %121 = vector.load %arg8[%c0_56, %c0_57] : memref<8x128xf32, #tpu.memory_space<vmem>>, vector<8x128xf32>
    tpu.vector_store %arg8[%c0_56, %c0_57], %115 {strides = array<i32>} : memref<8x128xf32, #tpu.memory_space<vmem>>, vector<8x128xf32>,
    return
  }
  func.func @transform_0(%arg0: i32, %arg1: i32) -> (i32, i32, i32) {
    %c0_i32 = arith.constant 0 : i32
    %c0_i32_0 = arith.constant 0 : i32
    return %arg1, %arg0, %c0_i32 : i32, i32, i32
  }
  func.func @transform_1(%arg0: i32, %arg1: i32) -> (i32, i32) {
    %c0_i32 = arith.constant 0 : i32
    %c0_i32_0 = arith.constant 0 : i32
    %c0_i32_1 = arith.constant 0 : i32
    return %c0_i32, %c0_i32_0 : i32, i32
  }
  func.func @transform_2(%arg0: i32, %arg1: i32) -> (i32, i32) {
    %c0_i32 = arith.constant 0 : i32
    %c0_i32_0 = arith.constant 0 : i32
    %c0_i32_1 = arith.constant 0 : i32
    return %c0_i32, %c0_i32_0 : i32, i32
  }
  func.func @transform_3(%arg0: i32, %arg1: i32) -> (i32, i32) {
    %c0_i32 = arith.constant 0 : i32
    %c0_i32_0 = arith.constant 0 : i32
    %c0_i32_1 = arith.constant 0 : i32
    return %c0_i32, %c0_i32_0 : i32, i32
  }
  func.func @transform_4(%arg0: i32, %arg1: i32) -> (i32, i32) {
    %c0_i32 = arith.constant 0 : i32
    %c0_i32_0 = arith.constant 0 : i32
    return %arg0, %c0_i32 : i32, i32
  }
  func.func @transform_5(%arg0: i32, %arg1: i32) -> (i32, i32, i32) {
    %c0_i32 = arith.constant 0 : i32
    %c0_i32_0 = arith.constant 0 : i32
    return %arg1, %arg0, %c0_i32 : i32, i32, i32
  }
}

</mosaic_0001>

<llo_original>
// kernel: tpu_custom_call.1
$region0: #{tpu_custom_call.1}
  #allocation0 [shape = 'u32[]', space=smem, size = 0x4, offset = 0x4, fixed_abs, tag = 'smem constant byte address 0x4 - core index']
  #allocation1 [shape = 'u32[144,128]{1,0:T(1,128)}', space=vmem, size = 0x12000, scoped, tag = 'internal scratch']
  #allocation2 [shape = 'f32[8,128]{1,0:T(8,128)}', space=vmem, size = 0x1000, scoped, tag = 'scratch operand']
  %s0 = inlined_call_operand.hbm [shape: bf16[8,8,8], index: 0, kind: input, shape index: {}]
  %s1 = inlined_call_operand.hbm [shape: bf16[8,128], index: 1, kind: input, shape index: {}]
  %s2 = inlined_call_operand.hbm [shape: bf16[128,128], index: 2, kind: input, shape index: {}]
  %s3 = inlined_call_operand.vmem [shape: f32[1,128], index: 3, kind: input, shape index: {}]
  %s4 = inlined_call_operand.vmem [shape: f32[8,128], index: 4, kind: input, shape index: {}]
  %s5 = inlined_call_operand.hbm [shape: bf16[8,8,128], index: 5, kind: output, shape index: {}]
  %s6 = sld [smem:[#allocation0]]
  $region46: #{tpu_custom_call.1} parent=0
    _
  %s8 = ssub.s32 1, %s6
  %s9 = scalar_select 0, %s8, %s6
  $region1: #{tpu_custom_call.1} parent=0
    #allocation3 [shape = 'u8[16384]{0}', space=vmem, size = 0x4000, scoped, tag = 'input window, operand 0, single buffered']
    #allocation4 [shape = 's32[1]{0}', space=sflag, size = 0x4, scoped, tag = 'scoped memory for tpu_custom_call.1']
    #allocation5 [shape = 's32[1]{0}', space=sflag, size = 0x4, scoped, tag = 'scoped memory for tpu_custom_call.1']
    #allocation6 [shape = 'u8[2048]{0}', space=vmem, size = 0x800, scoped, tag = 'input window, operand 1, single buffered']
    #allocation7 [shape = 's32[1]{0}', space=sflag, size = 0x4, scoped, tag = 'scoped memory for tpu_custom_call.1']
    #allocation8 [shape = 'u8[32768]{0}', space=vmem, size = 0x8000, scoped, tag = 'input window, operand 2, single buffered']
    #allocation9 [shape = 'u8[16384]{0}', space=vmem, size = 0x4000, scoped, tag = 'output window, operand 0, single buffered']
    %10 = vsyncpa [#allocation4], 0
    %11 = vsyncpa [#allocation7], 0
    %12 = vsyncpa [#allocation5], 0
    // Predicated region
    $region2: #{tpu_custom_call.1} parent=1 // pred_check
      _
    $region3: #{tpu_custom_call.1} parent=1 // pred_check_branch
      %14 = sbr.rel (0) target = $region5
    $region4: #{tpu_custom_call.1} parent=1 // pred_region
      %s16 = ssub.s32 512, 512
      %17 = vsyncadd [#allocation4], %s16
      %s18 = sshll.u32 [#allocation3], 4
      %s19 = int_to_ptr.vmem [resolvable:$true] %s18
      %24 = dma.hbm_to_vmem [thread:$0]  %s0, 512, %s19, [#allocation4], 64, 64, 4
    $region5: #{tpu_custom_call.1} parent=1 // pred_fallthru
      _
    // Predicated region
    $region6: #{tpu_custom_call.1} parent=1 // pred_check
      _
    $region7: #{tpu_custom_call.1} parent=1 // pred_check_branch
      %26 = sbr.rel (0) target = $region9
    $region8: #{tpu_custom_call.1} parent=1 // pred_region
      %s28 = ssub.s32 64, 64
      %29 = vsyncadd [#allocation7], %s28
      %s31 = sshll.u32 [#allocation6], 4
      %s32 = int_to_ptr.vmem [resolvable:$true] %s31
      %34 = dma.hbm_to_vmem [thread:$0]  %s1, 64, %s32, [#allocation7]
    $region9: #{tpu_custom_call.1} parent=1 // pred_fallthru
      _
    // Predicated region
    $region10: #{tpu_custom_call.1} parent=1 // pred_check
      _
    $region11: #{tpu_custom_call.1} parent=1 // pred_check_branch
      %36 = sbr.rel (0) target = $region13
    $region12: #{tpu_custom_call.1} parent=1 // pred_region
      %s38 = ssub.s32 1024, 1024
      %39 = vsyncadd [#allocation7], %s38
      %s40 = sshll.u32 [#allocation8], 4
      %s41 = int_to_ptr.vmem [resolvable:$true] %s40
      %46 = dma.hbm_to_vmem [thread:$0]  %s2, 1024, %s41, [#allocation7], 64, 64, 4
    $region13: #{tpu_custom_call.1} parent=1 // pred_fallthru
      _
    // Predicated region
    $region14: #{tpu_custom_call.1} parent=1 // pred_check
      _
    $region15: #{tpu_custom_call.1} parent=1 // pred_check_branch
      %48 = sbr.rel (0) target = $region17
    $region16: #{tpu_custom_call.1} parent=1 // pred_region
      _
    $region17: #{tpu_custom_call.1} parent=1 // pred_fallthru
      _
    // Predicated region
    $region18: #{tpu_custom_call.1} parent=1 // pred_check
      _
    $region19: #{tpu_custom_call.1} parent=1 // pred_check_branch
      %50 = sbr.rel (0) target = $region21
    $region20: #{tpu_custom_call.1} parent=1 // pred_region
      _
    $region21: #{tpu_custom_call.1} parent=1 // pred_fallthru
      _
    // Predicated region
    $region22: #{tpu_custom_call.1} parent=1 // pred_check
      _
    $region23: #{tpu_custom_call.1} parent=1 // pred_check_branch
      %52 = sbr.rel (0) target = $region25
    $region24: #{tpu_custom_call.1} parent=1 // pred_region
      %53 = dma.done [#allocation4], 512
    $region25: #{tpu_custom_call.1} parent=1 // pred_fallthru
      _
    // Predicated region
    $region26: #{tpu_custom_call.1} parent=1 // pred_check
      _
    $region27: #{tpu_custom_call.1} parent=1 // pred_check_branch
      %55 = sbr.rel (0) target = $region29
    $region28: #{tpu_custom_call.1} parent=1 // pred_region
      %56 = dma.done [#allocation7], 64
    $region29: #{tpu_custom_call.1} parent=1 // pred_fallthru
      _
    // Predicated region
    $region30: #{tpu_custom_call.1} parent=1 // pred_check
      _
    $region31: #{tpu_custom_call.1} parent=1 // pred_check_branch
      %58 = sbr.rel (0) target = $region33
    $region32: #{tpu_custom_call.1} parent=1 // pred_region
      %59 = dma.done [#allocation7], 1024
    $region33: #{tpu_custom_call.1} parent=1 // pred_fallthru
      _
    %p61 = scmp.eq.s32.totalorder 0, 0
    // Predicated region
    $region34: #{tpu_custom_call.1} parent=1 // pred_check
      %p62 = pneg %p61
    $region35: #{tpu_custom_call.1} parent=1 // pred_check_branch
      %64 = sbr.rel (%p62) target = $region37
    $region36: #{tpu_custom_call.1} parent=1 // pred_region
      %v65 = vld [vmem:[%s4] sm:$0xff]
      %66 = vst [vmem:[#allocation2] sm:$0xff] %v65
    $region37: #{tpu_custom_call.1} parent=1 // pred_fallthru
      _
    %v67 = vld [vmem:[#allocation6] sm:$0xf]
    %v68 = vld [vmem:[#allocation8] sm:$0xf]
    %v69 = vld [vmem:[#allocation8 + $0x4] sm:$0xf]
    %v70 = vld [vmem:[#allocation8 + $0x8] sm:$0xf]
    %v71 = vld [vmem:[#allocation8 + $0xc] sm:$0xf]
    %v72 = vld [vmem:[#allocation8 + $0x10] sm:$0xf]
    %v73 = vld [vmem:[#allocation8 + $0x14] sm:$0xf]
    %v74 = vld [vmem:[#allocation8 + $0x18] sm:$0xf]
    %v75 = vld [vmem:[#allocation8 + $0x1c] sm:$0xf]
    %v76 = vld [vmem:[#allocation8 + $0x20] sm:$0xf]
    %v77 = vld [vmem:[#allocation8 + $0x24] sm:$0xf]
    %v78 = vld [vmem:[#allocation8 + $0x28] sm:$0xf]
    %v79 = vld [vmem:[#allocation8 + $0x2c] sm:$0xf]
    %v80 = vld [vmem:[#allocation8 + $0x30] sm:$0xf]
    %v81 = vld [vmem:[#allocation8 + $0x34] sm:$0xf]
    %v82 = vld [vmem:[#allocation8 + $0x38] sm:$0xf]
    %v83 = vld [vmem:[#allocation8 + $0x3c] sm:$0xf]
    %v84 = vld [vmem:[%s3] sm:$0x1]
    %v86 = vlaneseq
    %v87 = vshrl.u32 %v86, 7
    %v88 = vsub.s32 0, %v87
    %v89 = vrot.slane %v84, %v88
    %v91 = vld [vmem:[#allocation2] sm:$0xff]
    %v92 = vld [vmem:[#allocation3] sm:$0xf]
    %v93 = vpack.c.bf16 %v91, %v91
    %v110 = vunpack.c.l.b16 %v68
    %v111 = vunpack.c.l.b16 %v69
    %v112 = vunpack.c.l.b16 %v70
    %v113 = vunpack.c.l.b16 %v71
    %v114 = vunpack.c.l.b16 %v72
    %v115 = vunpack.c.l.b16 %v73
    %v116 = vunpack.c.l.b16 %v74
    %v117 = vunpack.c.l.b16 %v75
    %v118 = vunpack.c.l.b16 %v76
    %v119 = vunpack.c.l.b16 %v77
    %v120 = vunpack.c.l.b16 %v78
    %v121 = vunpack.c.l.b16 %v79
    %v122 = vunpack.c.l.b16 %v80
    %v123 = vunpack.c.l.b16 %v81
    %v124 = vunpack.c.l.b16 %v82
    %v125 = vunpack.c.l.b16 %v83
    %v126 = vpack.c.b16 %v111, %v110
    %v127 = vpack.c.b16 %v113, %v112
    %v128 = vpack.c.b16 %v115, %v114
    %v129 = vpack.c.b16 %v117, %v116
    %v130 = vpack.c.b16 %v119, %v118
    %v131 = vpack.c.b16 %v121, %v120
    %v132 = vpack.c.b16 %v123, %v122
    %v133 = vpack.c.b16 %v125, %v124
    %142 = vmatprep.subr.bf16.mxu0 0
    %143 = vmatpush1.bf16.msra.mxu0 %v126
    %144 = vmatprep.subr.bf16.mxu0 0
    %145 = vmatpush1.bf16.msra.mxu0 %v127
    %146 = vmatprep.subr.bf16.mxu0 0
    %147 = vmatpush1.bf16.msra.mxu0 %v128
    %148 = vmatprep.subr.bf16.mxu0 0
    %149 = vmatpush1.bf16.msra.mxu0 %v129
    %150 = vmatprep.subr.bf16.mxu0 0
    %151 = vmatpush1.bf16.msra.mxu0 %v130
    %152 = vmatprep.subr.bf16.mxu0 0
    %153 = vmatpush1.bf16.msra.mxu0 %v131
    %154 = vmatprep.subr.bf16.mxu0 0
    %155 = vmatpush1.bf16.msra.mxu0 %v132
    %156 = vmatprep.subr.bf16.mxu0 0
    %157 = vmatpush1.bf16.msra.mxu0 %v133
    %158 = vmatprep.subr.bf16.mxu0 0
    %159 = vmatpush1.bf16.msra.mxu0 0
    %160 = vmatprep.subr.bf16.mxu0 0
    %161 = vmatpush1.bf16.msra.mxu0 0
    %162 = vmatprep.subr.bf16.mxu0 0
    %163 = vmatpush1.bf16.msra.mxu0 0
    %164 = vmatprep.subr.bf16.mxu0 0
    %165 = vmatpush1.bf16.msra.mxu0 0
    %166 = vmatprep.subr.bf16.mxu0 0
    %167 = vmatpush1.bf16.msra.mxu0 0
    %168 = vmatprep.subr.bf16.mxu0 0
    %169 = vmatpush1.bf16.msra.mxu0 0
    %170 = vmatprep.subr.bf16.mxu0 0
    %171 = vmatpush1.bf16.msra.mxu0 0
    %172 = vmatprep.subr.bf16.mxu0 0
    %173 = vmatpush1.bf16.msra.mxu0 0
    %174 = vmatprep.mubr.bf16.mxu0 0
    %175 = vmatmul.mubr.bf16.gmra.mrb[0].mxu0 %v93
    %v176 = vpop.f32.mrb[0].mxu0
    %v177 = vadd.f32 0.0, %v176
    %v178 = vpop.f32.mrb[0].mxu0
    %v179 = vpop.f32.mrb[0].mxu0
    %v180 = vpop.f32.mrb[0].mxu0
    %181 = vdwg.mxu0
    %vm182 = vcmask 64512
    %v184 = vsel %vm182, %v92, 0
    %vm186 = vcmask 1043456
    %v188 = vsel %vm186, %v67, 0
    %190 = vmatprep.subr.bf16.mxu0 0
    %191 = vmatpush1.bf16.msra.mxu0 %v188
    %192 = vmatprep.subr.bf16.mxu0 0
    %193 = vmatpush1.bf16.msra.mxu0 0
    %194 = vmatprep.subr.bf16.mxu0 0
    %195 = vmatpush1.bf16.msra.mxu0 0
    %196 = vmatprep.subr.bf16.mxu0 0
    %197 = vmatpush1.bf16.msra.mxu0 0
    %198 = vmatprep.subr.bf16.mxu0 0
    %199 = vmatpush1.bf16.msra.mxu0 0
    %200 = vmatprep.subr.bf16.mxu0 0
    %201 = vmatpush1.bf16.msra.mxu0 0
    %202 = vmatprep.subr.bf16.mxu0 0
    %203 = vmatpush1.bf16.msra.mxu0 0
    %204 = vmatprep.subr.bf16.mxu0 0
    %205 = vmatpush1.bf16.msra.mxu0 0
    %206 = vmatprep.subr.bf16.mxu0 0
    %207 = vmatpush1.bf16.msra.mxu0 0
    %208 = vmatprep.subr.bf16.mxu0 0
    %209 = vmatpush1.bf16.msra.mxu0 0
    %210 = vmatprep.subr.bf16.mxu0 0
    %211 = vmatpush1.bf16.msra.mxu0 0
    %212 = vmatprep.subr.bf16.mxu0 0
    %213 = vmatpush1.bf16.msra.mxu0 0
    %214 = vmatprep.subr.bf16.mxu0 0
    %215 = vmatpush1.bf16.msra.mxu0 0
    %216 = vmatprep.subr.bf16.mxu0 0
    %217 = vmatpush1.bf16.msra.mxu0 0
    %218 = vmatprep.subr.bf16.mxu0 0
    %219 = vmatpush1.bf16.msra.mxu0 0
    %220 = vmatprep.subr.bf16.mxu0 0
    %221 = vmatpush1.bf16.msra.mxu0 0
    %222 = vmatprep.mubr.bf16.mxu0 0
    %223 = vmatmul.mubr.bf16.gmra.mrb[0].mxu0 %v184
    %v224 = vpop.f32.mrb[0].mxu0
    %v225 = vadd.f32 %v177, %v224
    %v226 = vpop.f32.mrb[0].mxu0
    %v227 = vpop.f32.mrb[0].mxu0
    %v228 = vpop.f32.mrb[0].mxu0
    %229 = vdwg.mxu0
    %v230 = vadd.f32 %v225, %v89
    %v231 = vtanh.pop %v230
    %v232 = vpack.c.bf16 %v231, %v231
    %233 = vst [vmem:[#allocation9] sm:$0xf] %v232
    %s234 = scalar_lea.vmem [#allocation3], 4
    %v235 = vld [vmem:[%s234] sm:$0xf]
    %236 = vmatprep.subr.bf16.mxu0 0
    %237 = vmatpush1.bf16.msra.mxu0 %v126
    %238 = vmatprep.subr.bf16.mxu0 0
    %239 = vmatpush1.bf16.msra.mxu0 %v127
    %240 = vmatprep.subr.bf16.mxu0 0
    %241 = vmatpush1.bf16.msra.mxu0 %v128
    %242 = vmatprep.subr.bf16.mxu0 0
    %243 = vmatpush1.bf16.msra.mxu0 %v129
    %244 = vmatprep.subr.bf16.mxu0 0
    %245 = vmatpush1.bf16.msra.mxu0 %v130
    %246 = vmatprep.subr.bf16.mxu0 0
    %247 = vmatpush1.bf16.msra.mxu0 %v131
    %248 = vmatprep.subr.bf16.mxu0 0
    %249 = vmatpush1.bf16.msra.mxu0 %v132
    %250 = vmatprep.subr.bf16.mxu0 0
    %251 = vmatpush1.bf16.msra.mxu0 %v133
    %252 = vmatprep.subr.bf16.mxu0 0
    %253 = vmatpush1.bf16.msra.mxu0 0
    %254 = vmatprep.subr.bf16.mxu0 0
    %255 = vmatpush1.bf16.msra.mxu0 0
    %256 = vmatprep.subr.bf16.mxu0 0
    %257 = vmatpush1.bf16.msra.mxu0 0
    %258 = vmatprep.subr.bf16.mxu0 0
    %259 = vmatpush1.bf16.msra.mxu0 0
    %260 = vmatprep.subr.bf16.mxu0 0
    %261 = vmatpush1.bf16.msra.mxu0 0
    %262 = vmatprep.subr.bf16.mxu0 0
    %263 = vmatpush1.bf16.msra.mxu0 0
    %264 = vmatprep.subr.bf16.mxu0 0
    %265 = vmatpush1.bf16.msra.mxu0 0
    %266 = vmatprep.subr.bf16.mxu0 0
    %267 = vmatpush1.bf16.msra.mxu0 0
    %268 = vmatprep.mubr.bf16.mxu0 0
    %269 = vmatmul.mubr.bf16.gmra.mrb[0].mxu0 %v232
    %v270 = vpop.f32.mrb[0].mxu0
    %v271 = vadd.f32 0.0, %v270
    %v272 = vpop.f32.mrb[0].mxu0
    %v273 = vpop.f32.mrb[0].mxu0
    %v274 = vpop.f32.mrb[0].mxu0
    %275 = vdwg.mxu0
    %v277 = vsel %vm182, %v235, 0
    %279 = vmatprep.subr.bf16.mxu0 0
    %280 = vmatpush1.bf16.msra.mxu0 %v188
    %281 = vmatprep.subr.bf16.mxu0 0
    %282 = vmatpush1.bf16.msra.mxu0 0
    %283 = vmatprep.subr.bf16.mxu0 0
    %284 = vmatpush1.bf16.msra.mxu0 0
    %285 = vmatprep.subr.bf16.mxu0 0
    %286 = vmatpush1.bf16.msra.mxu0 0
    %287 = vmatprep.subr.bf16.mxu0 0
    %288 = vmatpush1.bf16.msra.mxu0 0
    %289 = vmatprep.subr.bf16.mxu0 0
    %290 = vmatpush1.bf16.msra.mxu0 0
    %291 = vmatprep.subr.bf16.mxu0 0
    %292 = vmatpush1.bf16.msra.mxu0 0
    %293 = vmatprep.subr.bf16.mxu0 0
    %294 = vmatpush1.bf16.msra.mxu0 0
    %295 = vmatprep.subr.bf16.mxu0 0
    %296 = vmatpush1.bf16.msra.mxu0 0
    %297 = vmatprep.subr.bf16.mxu0 0
    %298 = vmatpush1.bf16.msra.mxu0 0
    %299 = vmatprep.subr.bf16.mxu0 0
    %300 = vmatpush1.bf16.msra.mxu0 0
    %301 = vmatprep.subr.bf16.mxu0 0
    %302 = vmatpush1.bf16.msra.mxu0 0
    %303 = vmatprep.subr.bf16.mxu0 0
    %304 = vmatpush1.bf16.msra.mxu0 0
    %305 = vmatprep.subr.bf16.mxu0 0
    %306 = vmatpush1.bf16.msra.mxu0 0
    %307 = vmatprep.subr.bf16.mxu0 0
    %308 = vmatpush1.bf16.msra.mxu0 0
    %309 = vmatprep.subr.bf16.mxu0 0
    %310 = vmatpush1.bf16.msra.mxu0 0
    %311 = vmatprep.mubr.bf16.mxu0 0
    %312 = vmatmul.mubr.bf16.gmra.mrb[0].mxu0 %v277
    %v313 = vpop.f32.mrb[0].mxu0
    %v314 = vadd.f32 %v271, %v313
    %v315 = vpop.f32.mrb[0].mxu0
    %v316 = vpop.f32.mrb[0].mxu0
    %v317 = vpop.f32.mrb[0].mxu0
    %318 = vdwg.mxu0
    %v319 = vadd.f32 %v314, %v89
    %v320 = vtanh.pop %v319
    %v321 = vpack.c.bf16 %v320, %v320
    %s322 = scalar_lea.vmem [#allocation9], 4
    %323 = vst [vmem:[%s322] sm:$0xf] %v321
    %s324 = scalar_lea.vmem [#allocation3], 8
    %v325 = vld [vmem:[%s324] sm:$0xf]
    %326 = vmatprep.subr.bf16.mxu0 0
    %327 = vmatpush1.bf16.msra.mxu0 %v126
    %328 = vmatprep.subr.bf16.mxu0 0
    %329 = vmatpush1.bf16.msra.mxu0 %v127
    %330 = vmatprep.subr.bf16.mxu0 0
    %331 = vmatpush1.bf16.msra.mxu0 %v128
    %332 = vmatprep.subr.bf16.mxu0 0
    %333 = vmatpush1.bf16.msra.mxu0 %v129
    %334 = vmatprep.subr.bf16.mxu0 0
    %335 = vmatpush1.bf16.msra.mxu0 %v130
    %336 = vmatprep.subr.bf16.mxu0 0
    %337 = vmatpush1.bf16.msra.mxu0 %v131
    %338 = vmatprep.subr.bf16.mxu0 0
    %339 = vmatpush1.bf16.msra.mxu0 %v132
    %340 = vmatprep.subr.bf16.mxu0 0
    %341 = vmatpush1.bf16.msra.mxu0 %v133
    %342 = vmatprep.subr.bf16.mxu0 0
    %343 = vmatpush1.bf16.msra.mxu0 0
    %344 = vmatprep.subr.bf16.mxu0 0
    %345 = vmatpush1.bf16.msra.mxu0 0
    %346 = vmatprep.subr.bf16.mxu0 0
    %347 = vmatpush1.bf16.msra.mxu0 0
    %348 = vmatprep.subr.bf16.mxu0 0
    %349 = vmatpush1.bf16.msra.mxu0 0
    %350 = vmatprep.subr.bf16.mxu0 0
    %351 = vmatpush1.bf16.msra.mxu0 0
    %352 = vmatprep.subr.bf16.mxu0 0
    %353 = vmatpush1.bf16.msra.mxu0 0
    %354 = vmatprep.subr.bf16.mxu0 0
    %355 = vmatpush1.bf16.msra.mxu0 0
    %356 = vmatprep.subr.bf16.mxu0 0
    %357 = vmatpush1.bf16.msra.mxu0 0
    %358 = vmatprep.mubr.bf16.mxu0 0
    %359 = vmatmul.mubr.bf16.gmra.mrb[0].mxu0 %v321
    %v360 = vpop.f32.mrb[0].mxu0
    %v361 = vadd.f32 0.0, %v360
    %v362 = vpop.f32.mrb[0].mxu0
    %v363 = vpop.f32.mrb[0].mxu0
    %v364 = vpop.f32.mrb[0].mxu0
    %365 = vdwg.mxu0
    %v367 = vsel %vm182, %v325, 0
    %369 = vmatprep.subr.bf16.mxu0 0
    %370 = vmatpush1.bf16.msra.mxu0 %v188
    %371 = vmatprep.subr.bf16.mxu0 0
    %372 = vmatpush1.bf16.msra.mxu0 0
    %373 = vmatprep.subr.bf16.mxu0 0
    %374 = vmatpush1.bf16.msra.mxu0 0
    %375 = vmatprep.subr.bf16.mxu0 0
    %376 = vmatpush1.bf16.msra.mxu0 0
    %377 = vmatprep.subr.bf16.mxu0 0
    %378 = vmatpush1.bf16.msra.mxu0 0
    %379 = vmatprep.subr.bf16.mxu0 0
    %380 = vmatpush1.bf16.msra.mxu0 0
    %381 = vmatprep.subr.bf16.mxu0 0
    %382 = vmatpush1.bf16.msra.mxu0 0
    %383 = vmatprep.subr.bf16.mxu0 0
    %384 = vmatpush1.bf16.msra.mxu0 0
    %385 = vmatprep.subr.bf16.mxu0 0
    %386 = vmatpush1.bf16.msra.mxu0 0
    %387 = vmatprep.subr.bf16.mxu0 0
    %388 = vmatpush1.bf16.msra.mxu0 0
    %389 = vmatprep.subr.bf16.mxu0 0
    %390 = vmatpush1.bf16.msra.mxu0 0
    %391 = vmatprep.subr.bf16.mxu0 0
    %392 = vmatpush1.bf16.msra.mxu0 0
    %393 = vmatprep.subr.bf16.mxu0 0
    %394 = vmatpush1.bf16.msra.mxu0 0
    %395 = vmatprep.subr.bf16.mxu0 0
    %396 = vmatpush1.bf16.msra.mxu0 0
    %397 = vmatprep.subr.bf16.mxu0 0
    %398 = vmatpush1.bf16.msra.mxu0 0
    %399 = vmatprep.subr.bf16.mxu0 0
    %400 = vmatpush1.bf16.msra.mxu0 0
    %401 = vmatprep.mubr.bf16.mxu0 0
    %402 = vmatmul.mubr.bf16.gmra.mrb[0].mxu0 %v367
    %v403 = vpop.f32.mrb[0].mxu0
    %v404 = vadd.f32 %v361, %v403
    %v405 = vpop.f32.mrb[0].mxu0
    %v406 = vpop.f32.mrb[0].mxu0
    %v407 = vpop.f32.mrb[0].mxu0
    %408 = vdwg.mxu0
    %v409 = vadd.f32 %v404, %v89
    %v410 = vtanh.pop %v409
    %v411 = vpack.c.bf16 %v410, %v410
    %s412 = scalar_lea.vmem [#allocation9], 8
    %413 = vst [vmem:[%s412] sm:$0xf] %v411
    %s414 = scalar_lea.vmem [#allocation3], 12
    %v415 = vld [vmem:[%s414] sm:$0xf]
    %416 = vmatprep.subr.bf16.mxu0 0
    %417 = vmatpush1.bf16.msra.mxu0 %v126
    %418 = vmatprep.subr.bf16.mxu0 0
    %419 = vmatpush1.bf16.msra.mxu0 %v127
    %420 = vmatprep.subr.bf16.mxu0 0
    %421 = vmatpush1.bf16.msra.mxu0 %v128
    %422 = vmatprep.subr.bf16.mxu0 0
    %423 = vmatpush1.bf16.msra.mxu0 %v129
    %424 = vmatprep.subr.bf16.mxu0 0
    %425 = vmatpush1.bf16.msra.mxu0 %v130
    %426 = vmatprep.subr.bf16.mxu0 0
    %427 = vmatpush1.bf16.msra.mxu0 %v131
    %428 = vmatprep.subr.bf16.mxu0 0
    %429 = vmatpush1.bf16.msra.mxu0 %v132
    %430 = vmatprep.subr.bf16.mxu0 0
    %431 = vmatpush1.bf16.msra.mxu0 %v133
    %432 = vmatprep.subr.bf16.mxu0 0
    %433 = vmatpush1.bf16.msra.mxu0 0
    %434 = vmatprep.subr.bf16.mxu0 0
    %435 = vmatpush1.bf16.msra.mxu0 0
    %436 = vmatprep.subr.bf16.mxu0 0
    %437 = vmatpush1.bf16.msra.mxu0 0
    %438 = vmatprep.subr.bf16.mxu0 0
    %439 = vmatpush1.bf16.msra.mxu0 0
    %440 = vmatprep.subr.bf16.mxu0 0
    %441 = vmatpush1.bf16.msra.mxu0 0
    %442 = vmatprep.subr.bf16.mxu0 0
    %443 = vmatpush1.bf16.msra.mxu0 0
    %444 = vmatprep.subr.bf16.mxu0 0
    %445 = vmatpush1.bf16.msra.mxu0 0
    %446 = vmatprep.subr.bf16.mxu0 0
    %447 = vmatpush1.bf16.msra.mxu0 0
    %448 = vmatprep.mubr.bf16.mxu0 0
    %449 = vmatmul.mubr.bf16.gmra.mrb[0].mxu0 %v411
    %v450 = vpop.f32.mrb[0].mxu0
    %v451 = vadd.f32 0.0, %v450
    %v452 = vpop.f32.mrb[0].mxu0
    %v453 = vpop.f32.mrb[0].mxu0
    %v454 = vpop.f32.mrb[0].mxu0
    %455 = vdwg.mxu0
    %v457 = vsel %vm182, %v415, 0
    %459 = vmatprep.subr.bf16.mxu0 0
    %460 = vmatpush1.bf16.msra.mxu0 %v188
    %461 = vmatprep.subr.bf16.mxu0 0
    %462 = vmatpush1.bf16.msra.mxu0 0
    %463 = vmatprep.subr.bf16.mxu0 0
    %464 = vmatpush1.bf16.msra.mxu0 0
    %465 = vmatprep.subr.bf16.mxu0 0
    %466 = vmatpush1.bf16.msra.mxu0 0
    %467 = vmatprep.subr.bf16.mxu0 0
    %468 = vmatpush1.bf16.msra.mxu0 0
    %469 = vmatprep.subr.bf16.mxu0 0
    %470 = vmatpush1.bf16.msra.mxu0 0
    %471 = vmatprep.subr.bf16.mxu0 0
    %472 = vmatpush1.bf16.msra.mxu0 0
    %473 = vmatprep.subr.bf16.mxu0 0
    %474 = vmatpush1.bf16.msra.mxu0 0
    %475 = vmatprep.subr.bf16.mxu0 0
    %476 = vmatpush1.bf16.msra.mxu0 0
    %477 = vmatprep.subr.bf16.mxu0 0
    %478 = vmatpush1.bf16.msra.mxu0 0
    %479 = vmatprep.subr.bf16.mxu0 0
    %480 = vmatpush1.bf16.msra.mxu0 0
    %481 = vmatprep.subr.bf16.mxu0 0
    %482 = vmatpush1.bf16.msra.mxu0 0
    %483 = vmatprep.subr.bf16.mxu0 0
    %484 = vmatpush1.bf16.msra.mxu0 0
    %485 = vmatprep.subr.bf16.mxu0 0
    %486 = vmatpush1.bf16.msra.mxu0 0
    %487 = vmatprep.subr.bf16.mxu0 0
    %488 = vmatpush1.bf16.msra.mxu0 0
    %489 = vmatprep.subr.bf16.mxu0 0
    %490 = vmatpush1.bf16.msra.mxu0 0
    %491 = vmatprep.mubr.bf16.mxu0 0
    %492 = vmatmul.mubr.bf16.gmra.mrb[0].mxu0 %v457
    %v493 = vpop.f32.mrb[0].mxu0
    %v494 = vadd.f32 %v451, %v493
    %v495 = vpop.f32.mrb[0].mxu0
    %v496 = vpop.f32.mrb[0].mxu0
    %v497 = vpop.f32.mrb[0].mxu0
    %498 = vdwg.mxu0
    %v499 = vadd.f32 %v494, %v89
    %v500 = vtanh.pop %v499
    %v501 = vpack.c.bf16 %v500, %v500
    %s502 = scalar_lea.vmem [#allocation9], 12
    %503 = vst [vmem:[%s502] sm:$0xf] %v501
    %s504 = scalar_lea.vmem [#allocation3], 16
    %v505 = vld [vmem:[%s504] sm:$0xf]
    %506 = vmatprep.subr.bf16.mxu0 0
    %507 = vmatpush1.bf16.msra.mxu0 %v126
    %508 = vmatprep.subr.bf16.mxu0 0
    %509 = vmatpush1.bf16.msra.mxu0 %v127
    %510 = vmatprep.subr.bf16.mxu0 0
    %511 = vmatpush1.bf16.msra.mxu0 %v128
    %512 = vmatprep.subr.bf16.mxu0 0
    %513 = vmatpush1.bf16.msra.mxu0 %v129
    %514 = vmatprep.subr.bf16.mxu0 0
    %515 = vmatpush1.bf16.msra.mxu0 %v130
    %516 = vmatprep.subr.bf16.mxu0 0
    %517 = vmatpush1.bf16.msra.mxu0 %v131
    %518 = vmatprep.subr.bf16.mxu0 0
    %519 = vmatpush1.bf16.msra.mxu0 %v132
    %520 = vmatprep.subr.bf16.mxu0 0
    %521 = vmatpush1.bf16.msra.mxu0 %v133
    %522 = vmatprep.subr.bf16.mxu0 0
    %523 = vmatpush1.bf16.msra.mxu0 0
    %524 = vmatprep.subr.bf16.mxu0 0
    %525 = vmatpush1.bf16.msra.mxu0 0
    %526 = vmatprep.subr.bf16.mxu0 0
    %527 = vmatpush1.bf16.msra.mxu0 0
    %528 = vmatprep.subr.bf16.mxu0 0
    %529 = vmatpush1.bf16.msra.mxu0 0
    %530 = vmatprep.subr.bf16.mxu0 0
    %531 = vmatpush1.bf16.msra.mxu0 0
    %532 = vmatprep.subr.bf16.mxu0 0
    %533 = vmatpush1.bf16.msra.mxu0 0
    %534 = vmatprep.subr.bf16.mxu0 0
    %535 = vmatpush1.bf16.msra.mxu0 0
    %536 = vmatprep.subr.bf16.mxu0 0
    %537 = vmatpush1.bf16.msra.mxu0 0
    %538 = vmatprep.mubr.bf16.mxu0 0
    %539 = vmatmul.mubr.bf16.gmra.mrb[0].mxu0 %v501
    %v540 = vpop.f32.mrb[0].mxu0
    %v541 = vadd.f32 0.0, %v540
    %v542 = vpop.f32.mrb[0].mxu0
    %v543 = vpop.f32.mrb[0].mxu0
    %v544 = vpop.f32.mrb[0].mxu0
    %545 = vdwg.mxu0
    %v547 = vsel %vm182, %v505, 0
    %549 = vmatprep.subr.bf16.mxu0 0
    %550 = vmatpush1.bf16.msra.mxu0 %v188
    %551 = vmatprep.subr.bf16.mxu0 0
    %552 = vmatpush1.bf16.msra.mxu0 0
    %553 = vmatprep.subr.bf16.mxu0 0
    %554 = vmatpush1.bf16.msra.mxu0 0
    %555 = vmatprep.subr.bf16.mxu0 0
    %556 = vmatpush1.bf16.msra.mxu0 0
    %557 = vmatprep.subr.bf16.mxu0 0
    %558 = vmatpush1.bf16.msra.mxu0 0
    %559 = vmatprep.subr.bf16.mxu0 0
    %560 = vmatpush1.bf16.msra.mxu0 0
    %561 = vmatprep.subr.bf16.mxu0 0
    %562 = vmatpush1.bf16.msra.mxu0 0
    %563 = vmatprep.subr.bf16.mxu0 0
    %564 = vmatpush1.bf16.msra.mxu0 0
    %565 = vmatprep.subr.bf16.mxu0 0
    %566 = vmatpush1.bf16.msra.mxu0 0
    %567 = vmatprep.subr.bf16.mxu0 0
    %568 = vmatpush1.bf16.msra.mxu0 0
    %569 = vmatprep.subr.bf16.mxu0 0
    %570 = vmatpush1.bf16.msra.mxu0 0
    %571 = vmatprep.subr.bf16.mxu0 0
    %572 = vmatpush1.bf16.msra.mxu0 0
    %573 = vmatprep.subr.bf16.mxu0 0
    %574 = vmatpush1.bf16.msra.mxu0 0
    %575 = vmatprep.subr.bf16.mxu0 0
    %576 = vmatpush1.bf16.msra.mxu0 0
    %577 = vmatprep.subr.bf16.mxu0 0
    %578 = vmatpush1.bf16.msra.mxu0 0
    %579 = vmatprep.subr.bf16.mxu0 0
    %580 = vmatpush1.bf16.msra.mxu0 0
    %581 = vmatprep.mubr.bf16.mxu0 0
    %582 = vmatmul.mubr.bf16.gmra.mrb[0].mxu0 %v547
    %v583 = vpop.f32.mrb[0].mxu0
    %v584 = vadd.f32 %v541, %v583
    %v585 = vpop.f32.mrb[0].mxu0
    %v586 = vpop.f32.mrb[0].mxu0
    %v587 = vpop.f32.mrb[0].mxu0
    %588 = vdwg.mxu0
    %v589 = vadd.f32 %v584, %v89
    %v590 = vtanh.pop %v589
    %v591 = vpack.c.bf16 %v590, %v590
    %s592 = scalar_lea.vmem [#allocation9], 16
    %593 = vst [vmem:[%s592] sm:$0xf] %v591
    %s594 = scalar_lea.vmem [#allocation3], 20
    %v595 = vld [vmem:[%s594] sm:$0xf]
    %596 = vmatprep.subr.bf16.mxu0 0
    %597 = vmatpush1.bf16.msra.mxu0 %v126
    %598 = vmatprep.subr.bf16.mxu0 0
    %599 = vmatpush1.bf16.msra.mxu0 %v127
    %600 = vmatprep.subr.bf16.mxu0 0
    %601 = vmatpush1.bf16.msra.mxu0 %v128
    %602 = vmatprep.subr.bf16.mxu0 0
    %603 = vmatpush1.bf16.msra.mxu0 %v129
    %604 = vmatprep.subr.bf16.mxu0 0
    %605 = vmatpush1.bf16.msra.mxu0 %v130
    %606 = vmatprep.subr.bf16.mxu0 0
    %607 = vmatpush1.bf16.msra.mxu0 %v131
    %608 = vmatprep.subr.bf16.mxu0 0
    %609 = vmatpush1.bf16.msra.mxu0 %v132
    %610 = vmatprep.subr.bf16.mxu0 0
    %611 = vmatpush1.bf16.msra.mxu0 %v133
    %612 = vmatprep.subr.bf16.mxu0 0
    %613 = vmatpush1.bf16.msra.mxu0 0
    %614 = vmatprep.subr.bf16.mxu0 0
    %615 = vmatpush1.bf16.msra.mxu0 0
    %616 = vmatprep.subr.bf16.mxu0 0
    %617 = vmatpush1.bf16.msra.mxu0 0
    %618 = vmatprep.subr.bf16.mxu0 0
    %619 = vmatpush1.bf16.msra.mxu0 0
    %620 = vmatprep.subr.bf16.mxu0 0
    %621 = vmatpush1.bf16.msra.mxu0 0
    %622 = vmatprep.subr.bf16.mxu0 0
    %623 = vmatpush1.bf16.msra.mxu0 0
    %624 = vmatprep.subr.bf16.mxu0 0
    %625 = vmatpush1.bf16.msra.mxu0 0
    %626 = vmatprep.subr.bf16.mxu0 0
    %627 = vmatpush1.bf16.msra.mxu0 0
    %628 = vmatprep.mubr.bf16.mxu0 0
    %629 = vmatmul.mubr.bf16.gmra.mrb[0].mxu0 %v591
    %v630 = vpop.f32.mrb[0].mxu0
    %v631 = vadd.f32 0.0, %v630
    %v632 = vpop.f32.mrb[0].mxu0
    %v633 = vpop.f32.mrb[0].mxu0
    %v634 = vpop.f32.mrb[0].mxu0
    %635 = vdwg.mxu0
    %v637 = vsel %vm182, %v595, 0
    %639 = vmatprep.subr.bf16.mxu0 0
    %640 = vmatpush1.bf16.msra.mxu0 %v188
    %641 = vmatprep.subr.bf16.mxu0 0
    %642 = vmatpush1.bf16.msra.mxu0 0
    %643 = vmatprep.subr.bf16.mxu0 0
    %644 = vmatpush1.bf16.msra.mxu0 0
    %645 = vmatprep.subr.bf16.mxu0 0
    %646 = vmatpush1.bf16.msra.mxu0 0
    %647 = vmatprep.subr.bf16.mxu0 0
    %648 = vmatpush1.bf16.msra.mxu0 0
    %649 = vmatprep.subr.bf16.mxu0 0
    %650 = vmatpush1.bf16.msra.mxu0 0
    %651 = vmatprep.subr.bf16.mxu0 0
    %652 = vmatpush1.bf16.msra.mxu0 0
    %653 = vmatprep.subr.bf16.mxu0 0
    %654 = vmatpush1.bf16.msra.mxu0 0
    %655 = vmatprep.subr.bf16.mxu0 0
    %656 = vmatpush1.bf16.msra.mxu0 0
    %657 = vmatprep.subr.bf16.mxu0 0
    %658 = vmatpush1.bf16.msra.mxu0 0
    %659 = vmatprep.subr.bf16.mxu0 0
    %660 = vmatpush1.bf16.msra.mxu0 0
    %661 = vmatprep.subr.bf16.mxu0 0
    %662 = vmatpush1.bf16.msra.mxu0 0
    %663 = vmatprep.subr.bf16.mxu0 0
    %664 = vmatpush1.bf16.msra.mxu0 0
    %665 = vmatprep.subr.bf16.mxu0 0
    %666 = vmatpush1.bf16.msra.mxu0 0
    %667 = vmatprep.subr.bf16.mxu0 0
    %668 = vmatpush1.bf16.msra.mxu0 0
    %669 = vmatprep.subr.bf16.mxu0 0
    %670 = vmatpush1.bf16.msra.mxu0 0
    %671 = vmatprep.mubr.bf16.mxu0 0
    %672 = vmatmul.mubr.bf16.gmra.mrb[0].mxu0 %v637
    %v673 = vpop.f32.mrb[0].mxu0
    %v674 = vadd.f32 %v631, %v673
    %v675 = vpop.f32.mrb[0].mxu0
    %v676 = vpop.f32.mrb[0].mxu0
    %v677 = vpop.f32.mrb[0].mxu0
    %678 = vdwg.mxu0
    %v679 = vadd.f32 %v674, %v89
    %v680 = vtanh.pop %v679
    %v681 = vpack.c.bf16 %v680, %v680
    %s682 = scalar_lea.vmem [#allocation9], 20
    %683 = vst [vmem:[%s682] sm:$0xf] %v681
    %s684 = scalar_lea.vmem [#allocation3], 24
    %v685 = vld [vmem:[%s684] sm:$0xf]
    %686 = vmatprep.subr.bf16.mxu0 0
    %687 = vmatpush1.bf16.msra.mxu0 %v126
    %688 = vmatprep.subr.bf16.mxu0 0
    %689 = vmatpush1.bf16.msra.mxu0 %v127
    %690 = vmatprep.subr.bf16.mxu0 0
    %691 = vmatpush1.bf16.msra.mxu0 %v128
    %692 = vmatprep.subr.bf16.mxu0 0
    %693 = vmatpush1.bf16.msra.mxu0 %v129
    %694 = vmatprep.subr.bf16.mxu0 0
    %695 = vmatpush1.bf16.msra.mxu0 %v130
    %696 = vmatprep.subr.bf16.mxu0 0
    %697 = vmatpush1.bf16.msra.mxu0 %v131
    %698 = vmatprep.subr.bf16.mxu0 0
    %699 = vmatpush1.bf16.msra.mxu0 %v132
    %700 = vmatprep.subr.bf16.mxu0 0
    %701 = vmatpush1.bf16.msra.mxu0 %v133
    %702 = vmatprep.subr.bf16.mxu0 0
    %703 = vmatpush1.bf16.msra.mxu0 0
    %704 = vmatprep.subr.bf16.mxu0 0
    %705 = vmatpush1.bf16.msra.mxu0 0
    %706 = vmatprep.subr.bf16.mxu0 0
    %707 = vmatpush1.bf16.msra.mxu0 0
    %708 = vmatprep.subr.bf16.mxu0 0
    %709 = vmatpush1.bf16.msra.mxu0 0
    %710 = vmatprep.subr.bf16.mxu0 0
    %711 = vmatpush1.bf16.msra.mxu0 0
    %712 = vmatprep.subr.bf16.mxu0 0
    %713 = vmatpush1.bf16.msra.mxu0 0
    %714 = vmatprep.subr.bf16.mxu0 0
    %715 = vmatpush1.bf16.msra.mxu0 0
    %716 = vmatprep.subr.bf16.mxu0 0
    %717 = vmatpush1.bf16.msra.mxu0 0
    %718 = vmatprep.mubr.bf16.mxu0 0
    %719 = vmatmul.mubr.bf16.gmra.mrb[0].mxu0 %v681
    %v720 = vpop.f32.mrb[0].mxu0
    %v721 = vadd.f32 0.0, %v720
    %v722 = vpop.f32.mrb[0].mxu0
    %v723 = vpop.f32.mrb[0].mxu0
    %v724 = vpop.f32.mrb[0].mxu0
    %725 = vdwg.mxu0
    %v727 = vsel %vm182, %v685, 0
    %729 = vmatprep.subr.bf16.mxu0 0
    %730 = vmatpush1.bf16.msra.mxu0 %v188
    %731 = vmatprep.subr.bf16.mxu0 0
    %732 = vmatpush1.bf16.msra.mxu0 0
    %733 = vmatprep.subr.bf16.mxu0 0
    %734 = vmatpush1.bf16.msra.mxu0 0
    %735 = vmatprep.subr.bf16.mxu0 0
    %736 = vmatpush1.bf16.msra.mxu0 0
    %737 = vmatprep.subr.bf16.mxu0 0
    %738 = vmatpush1.bf16.msra.mxu0 0
    %739 = vmatprep.subr.bf16.mxu0 0
    %740 = vmatpush1.bf16.msra.mxu0 0
    %741 = vmatprep.subr.bf16.mxu0 0
    %742 = vmatpush1.bf16.msra.mxu0 0
    %743 = vmatprep.subr.bf16.mxu0 0
    %744 = vmatpush1.bf16.msra.mxu0 0
    %745 = vmatprep.subr.bf16.mxu0 0
    %746 = vmatpush1.bf16.msra.mxu0 0
    %747 = vmatprep.subr.bf16.mxu0 0
    %748 = vmatpush1.bf16.msra.mxu0 0
    %749 = vmatprep.subr.bf16.mxu0 0
    %750 = vmatpush1.bf16.msra.mxu0 0
    %751 = vmatprep.subr.bf16.mxu0 0
    %752 = vmatpush1.bf16.msra.mxu0 0
    %753 = vmatprep.subr.bf16.mxu0 0
    %754 = vmatpush1.bf16.msra.mxu0 0
    %755 = vmatprep.subr.bf16.mxu0 0
    %756 = vmatpush1.bf16.msra.mxu0 0
    %757 = vmatprep.subr.bf16.mxu0 0
    %758 = vmatpush1.bf16.msra.mxu0 0
    %759 = vmatprep.subr.bf16.mxu0 0
    %760 = vmatpush1.bf16.msra.mxu0 0
    %761 = vmatprep.mubr.bf16.mxu0 0
    %762 = vmatmul.mubr.bf16.gmra.mrb[0].mxu0 %v727
    %v763 = vpop.f32.mrb[0].mxu0
    %v764 = vadd.f32 %v721, %v763
    %v765 = vpop.f32.mrb[0].mxu0
    %v766 = vpop.f32.mrb[0].mxu0
    %v767 = vpop.f32.mrb[0].mxu0
    %768 = vdwg.mxu0
    %v769 = vadd.f32 %v764, %v89
    %v770 = vtanh.pop %v769
    %v771 = vpack.c.bf16 %v770, %v770
    %s772 = scalar_lea.vmem [#allocation9], 24
    %773 = vst [vmem:[%s772] sm:$0xf] %v771
    %s774 = scalar_lea.vmem [#allocation3], 28
    %v775 = vld [vmem:[%s774] sm:$0xf]
    %776 = vmatprep.subr.bf16.mxu0 0
    %777 = vmatpush1.bf16.msra.mxu0 %v126
    %778 = vmatprep.subr.bf16.mxu0 0
    %779 = vmatpush1.bf16.msra.mxu0 %v127
    %780 = vmatprep.subr.bf16.mxu0 0
    %781 = vmatpush1.bf16.msra.mxu0 %v128
    %782 = vmatprep.subr.bf16.mxu0 0
    %783 = vmatpush1.bf16.msra.mxu0 %v129
    %784 = vmatprep.subr.bf16.mxu0 0
    %785 = vmatpush1.bf16.msra.mxu0 %v130
    %786 = vmatprep.subr.bf16.mxu0 0
    %787 = vmatpush1.bf16.msra.mxu0 %v131
    %788 = vmatprep.subr.bf16.mxu0 0
    %789 = vmatpush1.bf16.msra.mxu0 %v132
    %790 = vmatprep.subr.bf16.mxu0 0
    %791 = vmatpush1.bf16.msra.mxu0 %v133
    %792 = vmatprep.subr.bf16.mxu0 0
    %793 = vmatpush1.bf16.msra.mxu0 0
    %794 = vmatprep.subr.bf16.mxu0 0
    %795 = vmatpush1.bf16.msra.mxu0 0
    %796 = vmatprep.subr.bf16.mxu0 0
    %797 = vmatpush1.bf16.msra.mxu0 0
    %798 = vmatprep.subr.bf16.mxu0 0
    %799 = vmatpush1.bf16.msra.mxu0 0
    %800 = vmatprep.subr.bf16.mxu0 0
    %801 = vmatpush1.bf16.msra.mxu0 0
    %802 = vmatprep.subr.bf16.mxu0 0
    %803 = vmatpush1.bf16.msra.mxu0 0
    %804 = vmatprep.subr.bf16.mxu0 0
    %805 = vmatpush1.bf16.msra.mxu0 0
    %806 = vmatprep.subr.bf16.mxu0 0
    %807 = vmatpush1.bf16.msra.mxu0 0
    %808 = vmatprep.mubr.bf16.mxu0 0
    %809 = vmatmul.mubr.bf16.gmra.mrb[0].mxu0 %v771
    %v810 = vpop.f32.mrb[0].mxu0
    %v811 = vadd.f32 0.0, %v810
    %v812 = vpop.f32.mrb[0].mxu0
    %v813 = vpop.f32.mrb[0].mxu0
    %v814 = vpop.f32.mrb[0].mxu0
    %815 = vdwg.mxu0
    %v817 = vsel %vm182, %v775, 0
    %819 = vmatprep.subr.bf16.mxu0 0
    %820 = vmatpush1.bf16.msra.mxu0 %v188
    %821 = vmatprep.subr.bf16.mxu0 0
    %822 = vmatpush1.bf16.msra.mxu0 0
    %823 = vmatprep.subr.bf16.mxu0 0
    %824 = vmatpush1.bf16.msra.mxu0 0
    %825 = vmatprep.subr.bf16.mxu0 0
    %826 = vmatpush1.bf16.msra.mxu0 0
    %827 = vmatprep.subr.bf16.mxu0 0
    %828 = vmatpush1.bf16.msra.mxu0 0
    %829 = vmatprep.subr.bf16.mxu0 0
    %830 = vmatpush1.bf16.msra.mxu0 0
    %831 = vmatprep.subr.bf16.mxu0 0
    %832 = vmatpush1.bf16.msra.mxu0 0
    %833 = vmatprep.subr.bf16.mxu0 0
    %834 = vmatpush1.bf16.msra.mxu0 0
    %835 = vmatprep.subr.bf16.mxu0 0
    %836 = vmatpush1.bf16.msra.mxu0 0
    %837 = vmatprep.subr.bf16.mxu0 0
    %838 = vmatpush1.bf16.msra.mxu0 0
    %839 = vmatprep.subr.bf16.mxu0 0
    %840 = vmatpush1.bf16.msra.mxu0 0
    %841 = vmatprep.subr.bf16.mxu0 0
    %842 = vmatpush1.bf16.msra.mxu0 0
    %843 = vmatprep.subr.bf16.mxu0 0
    %844 = vmatpush1.bf16.msra.mxu0 0
    %845 = vmatprep.subr.bf16.mxu0 0
    %846 = vmatpush1.bf16.msra.mxu0 0
    %847 = vmatprep.subr.bf16.mxu0 0
    %848 = vmatpush1.bf16.msra.mxu0 0
    %849 = vmatprep.subr.bf16.mxu0 0
    %850 = vmatpush1.bf16.msra.mxu0 0
    %851 = vmatprep.mubr.bf16.mxu0 0
    %852 = vmatmul.mubr.bf16.gmra.mrb[0].mxu0 %v817
    %v853 = vpop.f32.mrb[0].mxu0
    %v854 = vadd.f32 %v811, %v853
    %v855 = vpop.f32.mrb[0].mxu0
    %v856 = vpop.f32.mrb[0].mxu0
    %v857 = vpop.f32.mrb[0].mxu0
    %858 = vdwg.mxu0
    %v859 = vadd.f32 %v854, %v89
    %v860 = vtanh.pop %v859
    %v861 = vpack.c.bf16 %v860, %v860
    %s862 = scalar_lea.vmem [#allocation9], 28
    %863 = vst [vmem:[%s862] sm:$0xf] %v861
    %864 = vst [vmem:[#allocation2] sm:$0xff] %v860
    // Predicated region
    $region38: #{tpu_custom_call.1} parent=1 // pred_check
      _
    $region39: #{tpu_custom_call.1} parent=1 // pred_check_branch
      %866 = sbr.rel (0) target = $region41
    $region40: #{tpu_custom_call.1} parent=1 // pred_region
      %s868 = ssub.s32 512, 512
      %869 = vsyncadd [#allocation5], %s868
      %s870 = sshll.u32 [#allocation9], 4
      %s871 = int_to_ptr.vmem [resolvable:$true] %s870
      %876 = dma.vmem_to_hbm [thread:$0]  %s871, 512, %s5, [#allocation5], 64, 64, 4
    $region41: #{tpu_custom_call.1} parent=1 // pred_fallthru
      _
    // Predicated region
    $region42: #{tpu_custom_call.1} parent=1 // pred_check
      _
    $region43: #{tpu_custom_call.1} parent=1 // pred_check_branch
      %878 = sbr.rel (0) target = $region45
    $region44: #{tpu_custom_call.1} parent=1 // pred_region
      %879 = dma.done [#allocation5], 512
    $region45: #{tpu_custom_call.1} parent=1 // pred_fallthru
      _
    %880 = vsyncpa [#allocation4], 1
    %881 = vsyncpa [#allocation7], 1
    %882 = vsyncpa [#allocation5], 1

</llo_original>
